<compile_context>
chip_gen: v7x
topology: tpu7x:2x2x1
jax: 0.10.0
libtpu: 0.0.40
codegen_flags: <defaults>
</compile_context>

<pallas_src>
import functools
import math

import jax
import jax.numpy as jnp
from jax.experimental import pallas as pl
from jax.experimental.pallas import tpu as pltpu

TARGET_BLOCK_BYTES = 2 * 1024 * 1024   # ~2 MiB per block (per buffer)


def _round_up(a, b):
    return ((a + b - 1) // b) * b


def zero_mul_kernel(x_ref, o_ref):
    # Faithful to torch.Tensor.mul(0.0): an actual multiply on a lane-dense
    # block, so NaN/Inf inputs become NaN outputs (a plain zero-fill would
    # be 2x cheaper but semantically different).
    o_ref[...] = x_ref[...] * 0.0


@functools.partial(jax.jit, static_argnames=("stride",))
def zero_forward(x_nchw, stride=1):
    """x_nchw: (N, C, H, W). PyTorch-equivalent Zero(stride) forward."""
    x = x_nchw
    if stride != 1:
        # Strided spatial subsampling is pure indexing glue; keep it in XLA.
        # TODO(synk): fuse the subsample into the kernel (pl.Element index_map
        # on H + in-kernel W stride) to avoid this one materialization; for
        # typical NAS feature maps the resulting blocks would be tiny/masked,
        # so the XLA slice + lane-dense kernel is the better trade here.
        x = x[:, :, ::stride, ::stride]

    out_shape = x.shape
    dtype = x.dtype
    total = math.prod(out_shape)
    itemsize = jnp.dtype(dtype).itemsize
    sublane = max(8, 32 // itemsize)          # 8 (f32) / 16 (bf16) / 32 (i8/fp8)

    if total == 0 or total % 128 != 0:
        # Ragged or empty: a single fused XLA pass is already HBM-roofline
        # optimal for x*0 and avoids any pad+slice full-array copies.
        return x * 0.0

    # Widest lane-dense last dim that divides the element count (keeps stores
    # unmasked); only widen past 128 when enough rows remain for >=2 tiles.
    lanes = 128
    for cand in (1024, 512, 256):
        if total % cand == 0 and (total // cand) >= 2 * sublane:
            lanes = cand
            break
    rows = total // lanes

    # ~TARGET_BLOCK_BYTES per block, rounded to the dtype's sublane packing.
    tile_r = _round_up(max(sublane, TARGET_BLOCK_BYTES // (lanes * itemsize)),
                       sublane)
    if rows >= 2 * sublane:
        # Keep at least 2 grid steps so both v7x TensorCores get work.
        tile_r = min(tile_r, _round_up(pl.cdiv(rows, 2), sublane))
    if tile_r > rows:
        tile_r = rows                       # block == full array extent (legal)
    grid = (pl.cdiv(rows, tile_r),)         # trailing partial block is masked

    x2d = x.reshape(rows, lanes)            # free bitcast (total % lanes == 0)

    out2d = pl.pallas_call(
        zero_mul_kernel,
        out_shape=jax.ShapeDtypeStruct((rows, lanes), dtype),
        grid_spec=pltpu.PrefetchScalarGridSpec(
            num_scalar_prefetch=0,
            grid=grid,
            in_specs=[pl.BlockSpec((tile_r, lanes), lambda i: (i, 0))],
            out_specs=pl.BlockSpec((tile_r, lanes), lambda i: (i, 0)),
        ),
        compiler_params=pltpu.CompilerParams(
            dimension_semantics=("parallel",),     # shard across v7x's 2 TCs
            vmem_limit_bytes=32 * 1024 * 1024,     # headroom; 4x2MiB << 32MiB
        ),
    )(x2d)

    return out2d.reshape(out_shape)                # free bitcast back


def reference(x, stride):
    """Pure-JAX mirror of the PyTorch Zero.forward."""
    if stride == 1:
        return x * 0.0
    return x[:, :, ::stride, ::stride] * 0.0


if __name__ == "__main__":
    key = jax.random.PRNGKey(0)
    N, C, H, W = 2, 4, 16, 16
    x = jax.random.normal(key, (N, C, H, W), jnp.float32)
    # Plant a NaN to demonstrate mul(0.0)-faithful propagation.
    x = x.at[0, 0, 0, 0].set(jnp.nan)

    # stride = 1: same shape, zeros (NaN where input was NaN)
    out1 = jax.block_until_ready(zero_forward(x, stride=1))
    ref1 = reference(x, 1)
    assert out1.shape == (N, C, H, W), out1.shape
    assert bool(jnp.array_equal(out1, ref1, equal_nan=True))
    assert bool(jnp.isnan(out1[0, 0, 0, 0]))

    # stride = 2: spatially subsampled shape, zeros
    out2 = jax.block_until_ready(zero_forward(x, stride=2))
    ref2 = reference(x, 2)
    assert out2.shape == (N, C, H // 2, W // 2), out2.shape
    assert bool(jnp.array_equal(out2, ref2, equal_nan=True))

    print("KERNEL_OK")
</pallas_src>

<mosaic_0001>
module attributes {stable_mosaic.version = 11 : i64} {
  func.func @zero_mul_kernel(%arg0: i32, %arg1: memref<8x128xf32, #tpu.memory_space<vmem>>, %arg2: memref<8x128xf32, #tpu.memory_space<vmem>>) attributes {dimension_semantics = [#tpu.dimension_semantics<parallel>], iteration_bounds = array<i64: 2>, scalar_prefetch = 0 : i64, scratch_operands = 0 : i64, tpu.core_type = #tpu.core_type<tc>, window_params = [{transform_indices = @transform_0, window_bounds = array<i64: 8, 128>}, {transform_indices = @transform_1, window_bounds = array<i64: 8, 128>}]} {
    %c0 = arith.constant 0 : index
    %c0_0 = arith.constant 0 : index
    %0 = vector.load %arg1[%c0, %c0_0] : memref<8x128xf32, #tpu.memory_space<vmem>>, vector<8x128xf32>
    %cst = arith.constant 0.000000e+00 : f32
    %1 = vector.broadcast %cst : f32 to vector<8x128xf32>
    %2 = arith.mulf %0, %1 : vector<8x128xf32>
    %c0_1 = arith.constant 0 : index
    %c0_2 = arith.constant 0 : index
    %3 = vector.load %arg2[%c0_1, %c0_2] : memref<8x128xf32, #tpu.memory_space<vmem>>, vector<8x128xf32>
    tpu.vector_store %arg2[%c0_1, %c0_2], %2 {strides = array<i32>} : memref<8x128xf32, #tpu.memory_space<vmem>>, vector<8x128xf32>,
    return
  }
  func.func @transform_0(%arg0: i32) -> (i32, i32) {
    %c0_i32 = arith.constant 0 : i32
    %c0_i32_0 = arith.constant 0 : i32
    return %arg0, %c0_i32 : i32, i32
  }
  func.func @transform_1(%arg0: i32) -> (i32, i32) {
    %c0_i32 = arith.constant 0 : i32
    %c0_i32_0 = arith.constant 0 : i32
    return %arg0, %c0_i32 : i32, i32
  }
}

</mosaic_0001>

<llo_original>
// kernel: zero_forward.1
$region0: #{zero_forward.1}
  #allocation0 [shape = 'u32[]', space=smem, size = 0x4, offset = 0x4, fixed_abs, tag = 'smem constant byte address 0x4 - core index']
  #allocation1 [shape = 'u32[144,128]{1,0:T(1,128)}', space=vmem, size = 0x12000, scoped, tag = 'internal scratch']
  %s0 = inlined_call_operand.vmem [shape: f32[16,128], index: 0, kind: input, shape index: {}]
  %s1 = inlined_call_operand.vmem [shape: f32[16,128], index: 1, kind: output, shape index: {}]
  %s2 = sld [smem:[#allocation0]]
  $region37: #{zero_forward.1} parent=0
    _
  %s4 = ssub.s32 1, %s2
  %s5 = scalar_select 0, %s4, %s2
  loop: start=0, step=1, limit=4
  $region2: #{zero_forward.1} parent=0 // loop_pre_header
    _
  $region3: #{zero_forward.1} parent=0 // loop_header
    %s7 = sphi 0, %s11
    %p8 = scmp.ge.s32.totalorder %s7, 4
    %s17 = sphi 0, %s19
    %s20 = sphi 0, %s17
    %s21 = sphi 0, %s20
    %s37 = sphi 0, %s21
    %s43 = sphi 0, %s45
    %s46 = sphi 0, %s43
    %s47 = sphi 0, %s46
    %s63 = sphi 0, %s47
  $region4: #{zero_forward.1} parent=0 // loop_header_branch
    %10 = sbr.rel (%p8) target = $region8
  $region5: #{zero_forward.1} parent=0 // loop_body
    %s12 = ssub.s32 %s7, 1
    %s13 = ssub.s32 %s7, 2
    %s14 = sadd.s32 %s7, 1
    %s15 = ssub.s32 %s7, %s14
    %p16 = scmp.eq.s32.totalorder %s15, 0
    %s18 = sadd.s32 %s17, 1
    %s19 = scalar_select %p16, %s17, %s18
    %p22 = pneg %p16
    %p23 = scmp.eq.s32.totalorder %s7, 1
    %p24 = por %p22, %p23
    %p25 = scmp.ne.s32.totalorder %s17, %s20
    %p26 = scmp.eq.s32.totalorder %s7, 0
    %p27 = por %p25, %p26
    %p28 = scmp.ne.s32.totalorder %s17, %s20
    %p29 = scmp.eq.s32.totalorder %s12, 1
    %p30 = por %p28, %p29
    %p31 = scmp.ne.s32.totalorder %s20, %s21
    %p32 = scmp.eq.s32.totalorder %s12, 0
    %p33 = por %p31, %p32
    %p34 = scmp.ne.s32.totalorder %s20, %s21
    %p35 = scmp.eq.s32.totalorder %s13, 1
    %p36 = por %p34, %p35
    %p38 = scmp.ne.s32.totalorder %s21, %s37
    %p39 = scmp.eq.s32.totalorder %s13, 0
    %p40 = por %p38, %p39
    %s41 = ssub.s32 %s7, %s14
    %p42 = scmp.eq.s32.totalorder %s41, 0
    %s44 = sadd.s32 %s43, 1
    %s45 = scalar_select %p42, %s43, %s44
    %p48 = pneg %p42
    %p49 = scmp.eq.s32.totalorder %s7, 1
    %p50 = por %p48, %p49
    %p51 = scmp.ne.s32.totalorder %s43, %s46
    %p52 = scmp.eq.s32.totalorder %s7, 0
    %p53 = por %p51, %p52
    %p54 = scmp.ne.s32.totalorder %s43, %s46
    %p55 = scmp.eq.s32.totalorder %s12, 1
    %p56 = por %p54, %p55
    %p57 = scmp.ne.s32.totalorder %s46, %s47
    %p58 = scmp.eq.s32.totalorder %s12, 0
    %p59 = por %p57, %p58
    %p60 = scmp.ne.s32.totalorder %s46, %s47
    %p61 = scmp.eq.s32.totalorder %s13, 1
    %p62 = por %p60, %p61
    %p64 = scmp.ne.s32.totalorder %s47, %s63
    %p65 = scmp.eq.s32.totalorder %s13, 0
    %p66 = por %p64, %p65
    %p67 = scmp.le.s32.totalorder 1, %s7
    %p68 = scmp.lt.s32.totalorder %s7, 3
    %p69 = pnand %p67, %p68
    %p70 = pneg %p69
    // Predicated region
    $region9: #{zero_forward.1} parent=5 // pred_check
      _
    $region10: #{zero_forward.1} parent=5 // pred_check_branch
      %72 = sbr.rel (%p69) target = $region12
    $region11: #{zero_forward.1} parent=5 // pred_region
      %s73 = ssub.s32 %s7, 1
    $region12: #{zero_forward.1} parent=5 // pred_fallthru
      _
    %p74 = scmp.lt.s32.totalorder %s7, 2
    // Predicated region
    $region13: #{zero_forward.1} parent=5 // pred_check
      %p75 = pneg %p74
    $region14: #{zero_forward.1} parent=5 // pred_check_branch
      %77 = sbr.rel (%p75) target = $region16
    $region15: #{zero_forward.1} parent=5 // pred_region
      // Predicated region
      $region17: #{zero_forward.1} parent=15 // pred_check
        %p78 = pneg %p27
      $region18: #{zero_forward.1} parent=15 // pred_check_branch
        %80 = sbr.rel (%p78) target = $region20
      $region19: #{zero_forward.1} parent=15 // pred_region
        %p81 = scmp.lt.s32.totalorder %s7, 1
        %s82 = scalar_select %p81, %s7, 1
        %s83 = smul.addr %s82, 8
        %s84 = scalar_lea.vmem %s0, %s83
      $region20: #{zero_forward.1} parent=15 // pred_fallthru
        _
    $region16: #{zero_forward.1} parent=5 // pred_fallthru
      _
    %p85 = scmp.le.s32.totalorder 1, %s7
    %p86 = scmp.lt.s32.totalorder %s7, 3
    %p87 = pnand %p85, %p86
    %p88 = pneg %p87
    // Predicated region
    $region21: #{zero_forward.1} parent=5 // pred_check
      _
    $region22: #{zero_forward.1} parent=5 // pred_check_branch
      %90 = sbr.rel (%p87) target = $region24
    $region23: #{zero_forward.1} parent=5 // pred_region
      %s91 = ssub.s32 %s7, 1
      %p92 = scmp.lt.s32.totalorder %s12, 1
      %s93 = scalar_select %p92, %s12, 1
      %s94 = smul.addr %s93, 8
      %s95 = scalar_lea.vmem %s0, %s94
      %p96 = pneg %p33
      %p97 = pneg %p30
      %p98 = pneg %p59
      %p99 = pneg %p56
      %p100 = scmp.lt.s32.totalorder %s12, 1
      %s101 = scalar_select %p100, %s12, 1
      %s102 = smul.addr %s101, 8
      %s103 = scalar_lea.vmem %s1, %s102
      %p104 = scmp.lt.s32.totalorder %s12, 1
      %s105 = scalar_select %p104, %s12, 1
      %s106 = smul.addr %s105, 8
      %s107 = scalar_lea.vmem %s0, %s106
      %p108 = scmp.lt.s32.totalorder %s12, 1
      %s109 = scalar_select %p108, %s12, 1
      %s110 = smul.addr %s109, 8
      %s111 = scalar_lea.vmem %s1, %s110
      %v112 = vld [vmem:[%s107] sm:$0xff]
      %v113 = vmul.f32 %v112, 0.0
      %114 = vst [vmem:[%s111] sm:$0xff] %v113
      %p115 = scmp.lt.s32.totalorder %s12, 1
      %s116 = scalar_select %p115, %s12, 1
      %s117 = smul.addr %s116, 8
      %s118 = scalar_lea.vmem %s1, %s117
      // Predicated region
      $region25: #{zero_forward.1} parent=23 // pred_check
        %p119 = pneg %p56
      $region26: #{zero_forward.1} parent=23 // pred_check_branch
        %121 = sbr.rel (%p119) target = $region28
      $region27: #{zero_forward.1} parent=23 // pred_region
        _
      $region28: #{zero_forward.1} parent=23 // pred_fallthru
        _
    $region24: #{zero_forward.1} parent=5 // pred_fallthru
      _
    %p122 = scmp.le.s32.totalorder 2, %s7
    // Predicated region
    $region29: #{zero_forward.1} parent=5 // pred_check
      %p123 = pneg %p122
    $region30: #{zero_forward.1} parent=5 // pred_check_branch
      %125 = sbr.rel (%p123) target = $region32
    $region31: #{zero_forward.1} parent=5 // pred_region
      %s126 = ssub.s32 %s7, 2
      // Predicated region
      $region33: #{zero_forward.1} parent=31 // pred_check
        %p127 = pneg %p62
      $region34: #{zero_forward.1} parent=31 // pred_check_branch
        %129 = sbr.rel (%p127) target = $region36
      $region35: #{zero_forward.1} parent=31 // pred_region
        %p130 = scmp.lt.s32.totalorder %s13, 1
        %s131 = scalar_select %p130, %s13, 1
        %s132 = smul.addr %s131, 8
        %s133 = scalar_lea.vmem %s1, %s132
      $region36: #{zero_forward.1} parent=31 // pred_fallthru
        _
    $region32: #{zero_forward.1} parent=5 // pred_fallthru
      _
  $region6: #{zero_forward.1} parent=0 // loop_footer
    %s11 = sadd.s32 1, %s7
  $region7: #{zero_forward.1} parent=0 // loop_footer_branch
    %6 = sbr.rel target = $region3
  $region8: #{zero_forward.1} parent=0 // loop_exit
    _

</llo_original>
